<compile_context>
chip_gen: v5e
topology: v5e:2x2
jax: 0.10.0
libtpu: 0.0.40
codegen_flags: <defaults>
</compile_context>

<pallas_src>
import functools

import jax
import jax.numpy as jnp
from jax.experimental import pallas as pl
from jax.experimental.pallas import tpu as pltpu


# ----------------------------------------------------------------------------
# Kernel
# ----------------------------------------------------------------------------
def _make_linear_kernel(has_bias: bool):
    """o[i,j] = sum_k x[i,k] * w[k,j] (+ b[j]); f32 accumulation on the MXU."""

    def kernel(*refs):
        if has_bias:
            x_ref, w_ref, b_ref, o_ref, acc_ref = refs
        else:
            x_ref, w_ref, o_ref, acc_ref = refs
            b_ref = None

        k = pl.program_id(2)

        @pl.when(k == 0)
        def _():
            acc_ref[...] = jnp.zeros_like(acc_ref)

        # Weight is already (K, N) and pre-cast in HBM: plain x @ w MXU push,
        # no per-tile transpose (XLU) or cast (VPU) competing with vmatmul.
        acc_ref[...] += jnp.dot(
            x_ref[...], w_ref[...], preferred_element_type=jnp.float32
        )

        @pl.when(k == pl.num_programs(2) - 1)
        def _():
            out = acc_ref[...]
            if b_ref is not None:
                out = out + b_ref[...].astype(jnp.float32)  # (1, tn) broadcast
            o_ref[...] = out.astype(o_ref.dtype)

    return kernel


# ----------------------------------------------------------------------------
# Tile selection
# ----------------------------------------------------------------------------
def _vmem_capacity_bytes() -> int:
    try:
        info = pltpu.get_tpu_info()
        cap = int(getattr(info, "vmem_capacity_bytes", 0))
        if cap > 0:
            return cap
    except Exception:
        pass
    return 64 * 1024 * 1024  # conservative fallback (v7x per-TC physical VMEM)


def _round_up(x: int, m: int) -> int:
    return ((x + m - 1) // m) * m


_K_PAD_THRESHOLD = 1024  # K above this and not 128-aligned -> zero-pad K


def _fit_tk(kp: int, pref: int) -> int:
    """Largest K tile <= pref that divides kp exactly (exact accumulation)."""
    if kp <= pref:
        return kp
    if kp % 128 == 0:
        for cand in range(pref, 127, -128):
            if kp % cand == 0:
                return cand
    # kp not 128-aligned only survives to here for kp <= _K_PAD_THRESHOLD
    # (see wrapper), where a single full-K panel is small.
    return kp


# (tm, tn) candidates ordered by decreasing arithmetic intensity tm*tn/(tm+tn).
_TILE_CANDIDATES = (
    (1024, 2048),   # v5e / v6e class (128 MiB VMEM)
    (1024, 1024),   # v7x class (64 MiB VMEM)
    (768, 768),
    (512, 1024),
    (512, 512),
    (256, 512),
    (256, 256),
    (128, 256),
    (128, 128),
)
_TK_CANDIDATES = (1024, 512, 256, 128)


def _footprint(tm, tn, tk, in_bytes, out_bytes):
    return (
        2 * tm * tk * in_bytes       # x tile, double-buffered
        + 2 * tk * tn * in_bytes     # w tile, double-buffered
        + 2 * tm * tn * out_bytes    # out tile, double-buffered
        + tm * tn * 4                # f32 accumulator scratch
    )


def _select_tiles(M, N, Kp, in_bytes, out_bytes, budget):
    for tm_c, tn_c in _TILE_CANDIDATES:
        tm = M if M <= tm_c else tm_c
        tn = N if N <= tn_c else tn_c
        for tk_c in _TK_CANDIDATES:
            tk = _fit_tk(Kp, tk_c)
            if _footprint(tm, tn, tk, in_bytes, out_bytes) <= budget:
                return tm, tn, tk
    tm = M if M <= 128 else 128
    tn = N if N <= 128 else 128
    return tm, tn, _fit_tk(Kp, 128)


# ----------------------------------------------------------------------------
# Wrapper
# ----------------------------------------------------------------------------
@functools.partial(
    jax.jit, static_argnames=("compute_dtype", "block_m", "block_n", "block_k")
)
def linear_pallas(
    x,
    weight,
    bias=None,
    *,
    compute_dtype=None,   # e.g. jnp.bfloat16 to feed the MXU in bf16 (f32 acc)
    block_m=None,
    block_n=None,
    block_k=None,
):
    """F.linear(x, weight, bias) with the matmul done in a Pallas TPU kernel.

    x:      (..., in_features)
    weight: (out_features, in_features)  -- PyTorch convention (not transposed)
    bias:   (out_features,) or None
    """
    *lead, K = x.shape
    N, Kw = weight.shape
    assert Kw == K, f"in_features mismatch: {Kw} vs {K}"

    out_dtype = x.dtype
    x2d = x.reshape(-1, K)
    M = x2d.shape[0]
    if M == 0:
        return jnp.zeros((*lead, N), dtype=out_dtype)

    # One-time layout / dtype prep in HBM (outside the kernel):
    #  * transpose weight to (K, N) so the kernel never transposes per tile;
    #  * pre-cast to compute_dtype so the DMA moves narrow bytes (halves the
    #    weight / activation HBM traffic for bf16) instead of casting in-loop.
    # TODO(synk): in a real model, hoist the transpose/cast to parameter load
    # time so it is not repeated per forward call.
    w_kn = weight.T
    if compute_dtype is not None:
        x2d = x2d.astype(compute_dtype)
        w_kn = w_kn.astype(compute_dtype)

    # The K grid axis accumulates, so the K tile must divide K exactly (a
    # ragged K tile would fold garbage into in-bounds outputs).  Large,
    # non-128-aligned K is zero-padded (exact); small K uses a full-K panel.
    Kp = K
    if K % 128 != 0 and K > _K_PAD_THRESHOLD:
        Kp = _round_up(K, 128)
        x2d = jnp.pad(x2d, ((0, 0), (0, Kp - K)))
        w_kn = jnp.pad(w_kn, ((0, Kp - K), (0, 0)))

    in_bytes = jnp.dtype(x2d.dtype).itemsize
    out_bytes = jnp.dtype(out_dtype).itemsize

    cap = _vmem_capacity_bytes()
    # v5e/v6e: 128 MiB physical VMEM per TensorCore -> big tiles.
    # v7x (or unknown): 64 MiB physical -> stay well inside it.
    budget = (56 << 20) if cap >= (100 << 20) else (16 << 20)

    tm, tn, tk = _select_tiles(M, N, Kp, in_bytes, out_bytes, budget)
    if block_m is not None:
        tm = M if M <= block_m else block_m
    if block_n is not None:
        tn = N if N <= block_n else block_n
    if block_k is not None:
        tk = _fit_tk(Kp, block_k)

    # Megacore: if both parallel grid axes collapsed to one block, split N so
    # both TensorCores (v7x) get work.
    if M <= tm and N <= tn and N >= 256:
        tn_half = _round_up((N + 1) // 2, 128)
        if tn_half < N:
            tn = tn_half

    fp = _footprint(tm, tn, tk, in_bytes, out_bytes)
    vmem_limit = int(min(cap - (4 << 20), max(32 << 20, fp + (16 << 20))))

    grid_m = pl.cdiv(M, tm)
    grid_n = pl.cdiv(N, tn)
    grid_k = Kp // tk
    grid = (grid_m, grid_n, grid_k)

    x_spec = pl.BlockSpec((tm, tk), lambda i, j, k: (i, k))
    w_spec = pl.BlockSpec((tk, tn), lambda i, j, k: (k, j))   # weight is (K, N)
    o_spec = pl.BlockSpec((tm, tn), lambda i, j, k: (i, j))

    has_bias = bias is not None
    in_specs = [x_spec, w_spec]
    operands = [x2d, w_kn]
    if has_bias:
        in_specs.append(pl.BlockSpec((1, tn), lambda i, j, k: (0, j)))
        operands.append(bias.reshape(1, N))

    # Advisory cost estimate reflecting the real re-read traffic of the tiling
    # (x is re-read grid_n times, weight grid_m times).
    bytes_accessed = (
        M * Kp * in_bytes * grid_n
        + Kp * N * in_bytes * grid_m
        + M * N * out_bytes
    )
    if has_bias:
        bytes_accessed += N * jnp.dtype(bias.dtype).itemsize * grid_m
    cost = pl.CostEstimate(
        flops=2 * M * N * Kp, transcendentals=0, bytes_accessed=int(bytes_accessed)
    )

    y2d = pl.pallas_call(
        _make_linear_kernel(has_bias),
        out_shape=jax.ShapeDtypeStruct((M, N), out_dtype),
        grid_spec=pltpu.PrefetchScalarGridSpec(
            num_scalar_prefetch=0,
            grid=grid,
            in_specs=in_specs,
            out_specs=o_spec,
            scratch_shapes=[pltpu.VMEM((tm, tn), jnp.float32)],
        ),
        compiler_params=pltpu.CompilerParams(
            dimension_semantics=("parallel", "parallel", "arbitrary"),
            vmem_limit_bytes=vmem_limit,
        ),
        cost_estimate=cost,
    )(*operands)

    return y2d.reshape(*lead, N)


# ----------------------------------------------------------------------------
# Parameter init matching torch.nn.Linear.reset_parameters()
# ----------------------------------------------------------------------------
def init_linear_kaiming_uniform(key, in_features, out_features, dtype=jnp.float32):
    """weight, bias ~ U(-1/sqrt(fan_in), 1/sqrt(fan_in)) (kaiming_uniform, a=sqrt(5))."""
    kw, kb = jax.random.split(key)
    bound = 1.0 / jnp.sqrt(jnp.asarray(in_features, jnp.float32))
    weight = jax.random.uniform(
        kw, (out_features, in_features), dtype=dtype, minval=-bound, maxval=bound
    )
    bias = jax.random.uniform(
        kb, (out_features,), dtype=dtype, minval=-bound, maxval=bound
    )
    return weight, bias


if __name__ == "__main__":
    key = jax.random.PRNGKey(0)
    k_x, k_p, k_x2, k_p2 = jax.random.split(key, 4)

    # Small shapes consistent with the module forward: batch=2, seq=8, 32 -> 64.
    batch, seq, in_features, out_features = 2, 8, 32, 64
    x = jax.random.normal(k_x, (batch, seq, in_features), dtype=jnp.float32)
    weight, bias = init_linear_kaiming_uniform(k_p, in_features, out_features)

    y_ref = jnp.matmul(x, weight.T, precision=jax.lax.Precision.HIGHEST) + bias

    # with bias
    y = linear_pallas(x, weight, bias)
    jax.block_until_ready(y)
    assert y.shape == (batch, seq, out_features)
    assert jnp.allclose(y, y_ref, atol=1e-5, rtol=1e-5)

    # without bias
    y_nb = linear_pallas(x, weight, None)
    jax.block_until_ready(y_nb)
    assert jnp.allclose(y_nb, y_ref - bias, atol=1e-5, rtol=1e-5)

    # bf16 MXU path (f32 accumulation) -- numerics differ only by input rounding
    y_bf = linear_pallas(x, weight, bias, compute_dtype=jnp.bfloat16)
    jax.block_until_ready(y_bf)
    assert jnp.allclose(y_bf, y_ref, atol=3e-2, rtol=3e-2)

    # Forced multi-block tiling to exercise the K-accumulation / bias-at-last-k path.
    x2 = jax.random.normal(k_x2, (3, 128, 384), dtype=jnp.float32)
    w2, b2 = init_linear_kaiming_uniform(k_p2, 384, 512)
    y2 = linear_pallas(x2, w2, b2, block_m=128, block_n=256, block_k=128)
    jax.block_until_ready(y2)
    y2_ref = jnp.matmul(x2, w2.T, precision=jax.lax.Precision.HIGHEST) + b2
    assert jnp.allclose(y2, y2_ref, atol=1e-3, rtol=1e-3)

    print("KERNEL_OK")
</pallas_src>

<mosaic_0001>
module attributes {stable_mosaic.version = 11 : i64} {
  func.func @kernel(%arg0: i32, %arg1: i32, %arg2: i32, %arg3: memref<16x32xf32, #tpu.memory_space<vmem>>, %arg4: memref<32x64xf32, #tpu.memory_space<vmem>>, %arg5: memref<1x64xf32, #tpu.memory_space<vmem>>, %arg6: memref<16x64xf32, #tpu.memory_space<vmem>>, %arg7: memref<16x64xf32, #tpu.memory_space<vmem>>) attributes {dimension_semantics = [#tpu.dimension_semantics<parallel>, #tpu.dimension_semantics<parallel>, #tpu.dimension_semantics<arbitrary>], iteration_bounds = array<i64: 1, 1, 1>, scalar_prefetch = 0 : i64, scratch_operands = 1 : i64, tpu.core_type = #tpu.core_type<tc>, window_params = [{transform_indices = @transform_0, window_bounds = array<i64: 16, 32>}, {transform_indices = @transform_1, window_bounds = array<i64: 32, 64>}, {transform_indices = @transform_2, window_bounds = array<i64: 1, 64>}, {transform_indices = @transform_3, window_bounds = array<i64: 16, 64>}]} {
    %c0_i32 = arith.constant 0 : i32
    %0 = arith.cmpi eq, %arg2, %c0_i32 : i32
    %1 = arith.extui %0 : i1 to i32
    %c0_i32_0 = arith.constant 0 : i32
    %2 = arith.cmpi ne, %1, %c0_i32_0 : i32
    scf.if %2 {
      %cst_10 = arith.constant 0.000000e+00 : f32
      %12 = vector.broadcast %cst_10 : f32 to vector<16x64xf32>
      %c0_11 = arith.constant 0 : index
      %c0_12 = arith.constant 0 : index
      %13 = vector.load %arg7[%c0_11, %c0_12] : memref<16x64xf32, #tpu.memory_space<vmem>>, vector<16x64xf32>
      tpu.vector_store %arg7[%c0_11, %c0_12], %12 {strides = array<i32>} : memref<16x64xf32, #tpu.memory_space<vmem>>, vector<16x64xf32>,
    } else {
    }
    %c0 = arith.constant 0 : index
    %c0_1 = arith.constant 0 : index
    %3 = vector.load %arg7[%c0, %c0_1] : memref<16x64xf32, #tpu.memory_space<vmem>>, vector<16x64xf32>
    %c0_2 = arith.constant 0 : index
    %c0_3 = arith.constant 0 : index
    %4 = vector.load %arg3[%c0_2, %c0_3] : memref<16x32xf32, #tpu.memory_space<vmem>>, vector<16x32xf32>
    %c0_4 = arith.constant 0 : index
    %c0_5 = arith.constant 0 : index
    %5 = vector.load %arg4[%c0_4, %c0_5] : memref<32x64xf32, #tpu.memory_space<vmem>>, vector<32x64xf32>
    %cst = arith.constant dense<0.000000e+00> : vector<16x64xf32>
    %6 = tpu.matmul %4, %5, %cst {dimension_numbers = #tpu.dot_dimension_numbers<[1], [0], [0], [1], [0, 0, 1, 1], [], []>} : vector<16x32xf32>, vector<32x64xf32>, vector<16x64xf32> -> vector<16x64xf32>
    %7 = arith.addf %3, %6 : vector<16x64xf32>
    %c0_6 = arith.constant 0 : index
    %c0_7 = arith.constant 0 : index
    %8 = vector.load %arg7[%c0_6, %c0_7] : memref<16x64xf32, #tpu.memory_space<vmem>>, vector<16x64xf32>
    tpu.vector_store %arg7[%c0_6, %c0_7], %7 {strides = array<i32>} : memref<16x64xf32, #tpu.memory_space<vmem>>, vector<16x64xf32>,
    %c0_i32_8 = arith.constant 0 : i32
    %9 = arith.cmpi eq, %arg2, %c0_i32_8 : i32
    %10 = arith.extui %9 : i1 to i32
    %c0_i32_9 = arith.constant 0 : i32
    %11 = arith.cmpi ne, %10, %c0_i32_9 : i32
    scf.if %11 {
      %c0_10 = arith.constant 0 : index
      %c0_11 = arith.constant 0 : index
      %12 = vector.load %arg7[%c0_10, %c0_11] : memref<16x64xf32, #tpu.memory_space<vmem>>, vector<16x64xf32>
      %c0_12 = arith.constant 0 : index
      %c0_13 = arith.constant 0 : index
      %13 = vector.load %arg5[%c0_12, %c0_13] : memref<1x64xf32, #tpu.memory_space<vmem>>, vector<1x64xf32>
      %14 = vector.broadcast %13 : vector<1x64xf32> to vector<16x64xf32>
      %15 = arith.addf %12, %14 : vector<16x64xf32>
      %c0_14 = arith.constant 0 : index
      %c0_15 = arith.constant 0 : index
      %16 = vector.load %arg6[%c0_14, %c0_15] : memref<16x64xf32, #tpu.memory_space<vmem>>, vector<16x64xf32>
      tpu.vector_store %arg6[%c0_14, %c0_15], %15 {strides = array<i32>} : memref<16x64xf32, #tpu.memory_space<vmem>>, vector<16x64xf32>,
    } else {
    }
    return
  }
  func.func @transform_0(%arg0: i32, %arg1: i32, %arg2: i32) -> (i32, i32) {
    %c0_i32 = arith.constant 0 : i32
    return %arg0, %arg2 : i32, i32
  }
  func.func @transform_1(%arg0: i32, %arg1: i32, %arg2: i32) -> (i32, i32) {
    %c0_i32 = arith.constant 0 : i32
    return %arg2, %arg1 : i32, i32
  }
  func.func @transform_2(%arg0: i32, %arg1: i32, %arg2: i32) -> (i32, i32) {
    %c0_i32 = arith.constant 0 : i32
    %c0_i32_0 = arith.constant 0 : i32
    return %c0_i32, %arg1 : i32, i32
  }
  func.func @transform_3(%arg0: i32, %arg1: i32, %arg2: i32) -> (i32, i32) {
    %c0_i32 = arith.constant 0 : i32
    return %arg0, %arg1 : i32, i32
  }
}

</mosaic_0001>

<llo_original>
// kernel: linear_pallas.1
$region0: #{linear_pallas.1}
  #allocation0 [shape = 'u32[]', space=smem, size = 0x4, offset = 0x4, fixed_abs, tag = 'smem constant byte address 0x4 - core index']
  #allocation1 [shape = 'u32[72,128]{1,0:T(1,128)}', space=vmem, size = 0x9000, scoped, tag = 'internal scratch']
  #allocation2 [shape = 'f32[16,64]{1,0:T(8,128)}', space=vmem, size = 0x2000, scoped, tag = 'scratch operand']
  %s0 = inlined_call_operand.hbm [shape: f32[16,32], index: 0, kind: input, shape index: {}]
  %s1 = inlined_call_operand.hbm [shape: f32[32,64], index: 1, kind: input, shape index: {}]
  %s2 = inlined_call_operand.vmem [shape: f32[1,64], index: 2, kind: input, shape index: {}]
  %s3 = inlined_call_operand.hbm [shape: f32[16,64], index: 3, kind: output, shape index: {}]
  %s4 = sld [smem:[#allocation0]]
  $region38: #{linear_pallas.1} parent=0
    _
  %s6 = ssub.s32 1, %s4
  %s7 = scalar_select 0, %s6, %s4
  $region1: #{linear_pallas.1} parent=0
    #allocation3 [shape = 'u8[8192]{0}', space=vmem, size = 0x2000, scoped, tag = 'input window, operand 0, single buffered']
    #allocation4 [shape = 's32[1]{0}', space=sflag, size = 0x4, scoped, tag = 'scoped memory for linear_pallas.1']
    #allocation5 [shape = 's32[1]{0}', space=sflag, size = 0x4, scoped, tag = 'scoped memory for linear_pallas.1']
    #allocation6 [shape = 'u8[16384]{0}', space=vmem, size = 0x4000, scoped, tag = 'input window, operand 1, single buffered']
    #allocation7 [shape = 's32[1]{0}', space=sflag, size = 0x4, scoped, tag = 'scoped memory for linear_pallas.1']
    #allocation8 [shape = 'u8[8192]{0}', space=vmem, size = 0x2000, scoped, tag = 'output window, operand 0, single buffered']
    %8 = vsyncpa [#allocation4], 0
    %9 = vsyncpa [#allocation7], 0
    %10 = vsyncpa [#allocation5], 0
    // Predicated region
    $region2: #{linear_pallas.1} parent=1 // pred_check
      _
    $region3: #{linear_pallas.1} parent=1 // pred_check_branch
      %12 = sbr.rel (0) target = $region5
    $region4: #{linear_pallas.1} parent=1 // pred_region
      %14 = vsyncadd [#allocation4], 0
      %s15 = sshll.u32 %s0, 4
      %s16 = int_to_ptr.hbm [resolvable:$true] %s15
      %s17 = sshll.u32 [#allocation3], 4
      %s18 = int_to_ptr.vmem [resolvable:$true] %s17
      %23 = dma.hbm_to_vmem [thread:$0]  %s16, 256, %s18, [#allocation4], 128, 128, 8
    $region5: #{linear_pallas.1} parent=1 // pred_fallthru
      _
    // Predicated region
    $region6: #{linear_pallas.1} parent=1 // pred_check
      _
    $region7: #{linear_pallas.1} parent=1 // pred_check_branch
      %25 = sbr.rel (0) target = $region9
    $region8: #{linear_pallas.1} parent=1 // pred_region
      %27 = vsyncadd [#allocation7], 0
      %s28 = sshll.u32 %s1, 4
      %s29 = int_to_ptr.hbm [resolvable:$true] %s28
      %s30 = sshll.u32 [#allocation6], 4
      %s31 = int_to_ptr.vmem [resolvable:$true] %s30
      %36 = dma.hbm_to_vmem [thread:$0]  %s29, 512, %s31, [#allocation7], 128, 128, 8
    $region9: #{linear_pallas.1} parent=1 // pred_fallthru
      _
    // Predicated region
    $region10: #{linear_pallas.1} parent=1 // pred_check
      _
    $region11: #{linear_pallas.1} parent=1 // pred_check_branch
      %38 = sbr.rel (0) target = $region13
    $region12: #{linear_pallas.1} parent=1 // pred_region
      _
    $region13: #{linear_pallas.1} parent=1 // pred_fallthru
      _
    // Predicated region
    $region14: #{linear_pallas.1} parent=1 // pred_check
      _
    $region15: #{linear_pallas.1} parent=1 // pred_check_branch
      %40 = sbr.rel (0) target = $region17
    $region16: #{linear_pallas.1} parent=1 // pred_region
      %42 = dma.done [#allocation4], 256
    $region17: #{linear_pallas.1} parent=1 // pred_fallthru
      _
    // Predicated region
    $region18: #{linear_pallas.1} parent=1 // pred_check
      _
    $region19: #{linear_pallas.1} parent=1 // pred_check_branch
      %44 = sbr.rel (0) target = $region21
    $region20: #{linear_pallas.1} parent=1 // pred_region
      %46 = dma.done [#allocation7], 512
    $region21: #{linear_pallas.1} parent=1 // pred_fallthru
      _
    %p47 = scmp.eq.s32.totalorder 0, 0
    // Predicated region
    $region22: #{linear_pallas.1} parent=1 // pred_check
      %p48 = pneg %p47
    $region23: #{linear_pallas.1} parent=1 // pred_check_branch
      %50 = sbr.rel (%p48) target = $region25
    $region24: #{linear_pallas.1} parent=1 // pred_region
      %vm51 = vcmask 523264
      %52 = vst.msk [vmem:[#allocation2] sm:$0xff] %vm51, 0.0
      %53 = vst.msk [vmem:[#allocation2 + $0x8] sm:$0xff] %vm51, 0.0
    $region25: #{linear_pallas.1} parent=1 // pred_fallthru
      _
    %v54 = vld [vmem:[#allocation2] sm:$0xff]
    %v55 = vld [vmem:[#allocation2 + $0x8] sm:$0xff]
    %v56 = vld [vmem:[#allocation3] sm:$0xff]
    %v57 = vld [vmem:[#allocation3 + $0x8] sm:$0xff]
    %v58 = vld [vmem:[#allocation6] sm:$0xff]
    %v59 = vld [vmem:[#allocation6 + $0x8] sm:$0xff]
    %v60 = vld [vmem:[#allocation6 + $0x10] sm:$0xff]
    %v61 = vld [vmem:[#allocation6 + $0x18] sm:$0xff]
    %vm62 = vcmask 261120
    %v64 = vsel %vm62, %v56, 0
    %v67 = vsel %vm62, %v57, 0
    %69 = vmatpush.msra.mxu0 0.0
    %70 = vmatpush.msra.mxu0 0.0
    %71 = vmatpush.msra.mxu0 0.0
    %72 = vmatpush.msra.mxu0 0.0
    %73 = vmatpush.msra.mxu0 0.0
    %74 = vmatpush.msra.mxu0 0.0
    %75 = vmatpush.msra.mxu0 0.0
    %76 = vmatpush.msra.mxu0 0.0
    %77 = vmatpush.msra.mxu0 0.0
    %78 = vmatpush.msra.mxu0 0.0
    %79 = vmatpush.msra.mxu0 0.0
    %80 = vmatpush.msra.mxu0 0.0
    %81 = vmatpush.msra.mxu0 %v61
    %82 = vmatpush.msra.mxu0 %v60
    %83 = vmatpush.msra.mxu0 %v59
    %84 = vmatpush.msra.mxu0 %v58
    %85 = vmatmul.f32.gmra.mxu0 %v64
    %v86 = vpop.f32.mrf.mxu0
    %v87 = vadd.f32 0.0, %v86
    %88 = vmatmul.f32.gmra.mxu0 %v67
    %v89 = vpop.f32.mrf.mxu0
    %v90 = vadd.f32 0.0, %v89
    %91 = vdwg.mxu0
    %v92 = vadd.f32 %v54, %v87
    %v93 = vadd.f32 %v55, %v90
    %vm94 = vcmask 523264
    %95 = vst.msk [vmem:[#allocation2] sm:$0xff] %vm94, %v92
    %96 = vst.msk [vmem:[#allocation2 + $0x8] sm:$0xff] %vm94, %v93
    // Predicated region
    $region26: #{linear_pallas.1} parent=1 // pred_check
      %p97 = pneg %p47
    $region27: #{linear_pallas.1} parent=1 // pred_check_branch
      %99 = sbr.rel (%p97) target = $region29
    $region28: #{linear_pallas.1} parent=1 // pred_region
      %v100 = vld [vmem:[#allocation2] sm:$0xff]
      %v101 = vld [vmem:[#allocation2 + $0x8] sm:$0xff]
      %v102 = vld [vmem:[%s2] sm:$0x1]
      %v104 = vperm.slane %v102, 0
      %v106 = vadd.f32 %v100, %v104
      %v107 = vadd.f32 %v101, %v104
      %108 = vst.msk [vmem:[#allocation8] sm:$0xff] %vm94, %v106
      %109 = vst.msk [vmem:[#allocation8 + $0x8] sm:$0xff] %vm94, %v107
    $region29: #{linear_pallas.1} parent=1 // pred_fallthru
      _
    // Predicated region
    $region30: #{linear_pallas.1} parent=1 // pred_check
      _
    $region31: #{linear_pallas.1} parent=1 // pred_check_branch
      %111 = sbr.rel (0) target = $region33
    $region32: #{linear_pallas.1} parent=1 // pred_region
      %113 = vsyncadd [#allocation5], 0
      %s114 = sshll.u32 [#allocation8], 4
      %s115 = int_to_ptr.vmem [resolvable:$true] %s114
      %s116 = sshll.u32 %s3, 4
      %s117 = int_to_ptr.hbm [resolvable:$true] %s116
      %122 = dma.vmem_to_hbm [thread:$0]  %s115, 256, %s117, [#allocation5], 128, 128, 8
    $region33: #{linear_pallas.1} parent=1 // pred_fallthru
      _
    // Predicated region
    $region34: #{linear_pallas.1} parent=1 // pred_check
      _
    $region35: #{linear_pallas.1} parent=1 // pred_check_branch
      %124 = sbr.rel (0) target = $region37
    $region36: #{linear_pallas.1} parent=1 // pred_region
      %126 = dma.done [#allocation5], 256
    $region37: #{linear_pallas.1} parent=1 // pred_fallthru
      _
    %127 = vsyncpa [#allocation4], 1
    %128 = vsyncpa [#allocation7], 1
    %129 = vsyncpa [#allocation5], 1

</llo_original>
